<compile_context>
chip_gen: v6e
topology: v6e:2x2x1
jax: 0.10.0
libtpu: 0.0.40
codegen_flags: <defaults>
</compile_context>

<pallas_src>
import math
from functools import partial

import jax
import jax.numpy as jnp
import numpy as np
from jax import lax
from jax.experimental import pallas as pl
from jax.experimental.pallas import tpu as pltpu

_LANES = 128     # batch fills the 128-lane axis (lane-dense loads/stores)
_SUB = 64        # rows per in-kernel chunk: 8 vregs per live array -> no spills
_LOG_2PI = math.log(2.0 * math.pi)


def _ceil_to(v, m):
    return -(-v // m) * m


def make_ill_reward(x=0.0, y=0.0, std=0.25, ill_std=0.01, pos=0.8,
                    *, block_rows=2048):
    """Build a jitted forward: a (N, 2) float32 -> (N, 1) float32."""
    std = float(std)
    ill_std = float(ill_std)
    pos = float(pos)
    x = float(x)
    y = float(y)
    block_rows = max(_SUB, int(block_rows))

    # ---- constants folded at trace time -----------------------------------
    kc = -0.5 / (std * std)                        # corner exponent scale (-8)
    ki = -0.5 / (ill_std * ill_std)                # ill-center exponent scale
    cc = 1.0 / (2.0 * math.pi * std * std)         # corner normalization
    ci = 1.0 / (2.0 * math.pi * ill_std * ill_std)
    # weights from the PyTorch forward: left_up, left_bottom, right_up,
    # right_bottom, ill_center
    c_lu, c_lb, c_ru, c_rb = 1.0 * cc, 1.5 * cc, 2.0 * cc, 3.0 * cc
    c_i = 1.0 * ci

    def _kernel(a_ref, out_ref, *, chunks):
        # a_ref: (2, br, 128) f32 in VMEM; out_ref: (br, 128) f32 in VMEM.
        def body(i, carry):
            off = pl.multiple_of(i * _SUB, _SUB)
            a0 = a_ref[0, pl.ds(off, _SUB), :]
            a1 = a_ref[1, pl.ds(off, _SUB), :]

            # Per-axis Gaussian factors shared by all four corner modes
            # (exp args are all <= 0, so no overflow for any input).
            dm0 = a0 + pos
            dp0 = a0 - pos
            dm1 = a1 + pos
            dp1 = a1 - pos
            u_m = jnp.exp(kc * (dm0 * dm0))   # axis-0 factor for mu0 = -pos
            u_p = jnp.exp(kc * (dp0 * dp0))   # axis-0 factor for mu0 = +pos
            v_m = jnp.exp(kc * (dm1 * dm1))   # axis-1 factor for mu1 = -pos
            v_p = jnp.exp(kc * (dp1 * dp1))   # axis-1 factor for mu1 = +pos

            corners = (u_m * (c_lu * v_p + c_lb * v_m)
                       + u_p * (c_ru * v_p + c_rb * v_m))

            d0 = a0 - x if x != 0.0 else a0
            d1 = a1 - y if y != 0.0 else a1
            ill = c_i * jnp.exp(ki * (d0 * d0 + d1 * d1))

            out_ref[pl.ds(off, _SUB), :] = corners + ill
            return carry

        lax.fori_loop(0, chunks, body, 0, unroll=min(chunks, 4))

    @jax.jit
    def forward(a):
        a = a.astype(jnp.float32)
        n = a.shape[0]

        # Lane-dense layout: batch fills the 128-lane axis; rows are sublanes.
        rows = _ceil_to(-(-n // _LANES), _SUB)                 # multiple of 64
        br = max(_SUB, (min(block_rows, rows) // _SUB) * _SUB)
        if rows // br < 2 and rows >= 2 * _SUB:
            # Ensure >= 2 grid steps so both v7x TensorCores get work.
            br = max(_SUB, ((rows // 2) // _SUB) * _SUB)
        rows = _ceil_to(rows, br)
        padded = rows * _LANES
        grid = (rows // br,)

        # Single input slab: (2, rows, 128) -- one DMA stream for both coords.
        a2 = jnp.pad(a.T, ((0, 0), (0, padded - n))).reshape(2, rows, _LANES)

        out = pl.pallas_call(
            partial(_kernel, chunks=br // _SUB),
            out_shape=jax.ShapeDtypeStruct((rows, _LANES), jnp.float32),
            grid=grid,
            in_specs=[pl.BlockSpec((2, br, _LANES), lambda i: (0, i, 0))],
            out_specs=pl.BlockSpec((br, _LANES), lambda i: (i, 0)),
            compiler_params=pltpu.CompilerParams(
                dimension_semantics=("parallel",)),
            cost_estimate=pl.CostEstimate(
                flops=30 * padded,
                transcendentals=5 * padded,
                bytes_accessed=12 * padded),
        )(a2)

        # Drop padding, restore (N, 1).  Fused by XLA since we are under jit.
        return out.reshape(padded)[:n].reshape(n, 1)

    return forward


def ill_reward_ref(a, x=0.0, y=0.0, std=0.25, ill_std=0.01, pos=0.8):
    """Pure-JAX reference matching the PyTorch forward (log_prob -> exp)."""
    a = a.astype(jnp.float32)
    mus = jnp.array([[-pos, pos], [-pos, -pos], [pos, pos], [pos, -pos], [x, y]],
                    dtype=jnp.float32)
    stds = jnp.array([[std, std]] * 4 + [[ill_std, ill_std]], dtype=jnp.float32)
    weights = jnp.array([1.0, 1.5, 2.0, 3.0, 1.0], dtype=jnp.float32)
    z = (a[:, None, :] - mus[None, :, :]) / stds[None, :, :]          # (N, 5, 2)
    lp = -0.5 * z * z - jnp.log(stds)[None, :, :] - 0.5 * _LOG_2PI    # (N, 5, 2)
    dens = jnp.exp(lp.sum(axis=-1))                                   # (N, 5)
    return (dens * weights[None, :]).sum(axis=-1, keepdims=True)      # (N, 1)


if __name__ == "__main__":
    key = jax.random.PRNGKey(0)
    k1, k2 = jax.random.split(key)

    # Case 1: small, non-multiple-of-128 batch (exercises the padding path).
    fwd = make_ill_reward()
    a_small = jax.random.uniform(k1, (37, 2), jnp.float32, -1.0, 1.0)
    out_small = jax.block_until_ready(fwd(a_small))
    ref_small = ill_reward_ref(a_small)
    np.testing.assert_allclose(np.asarray(out_small), np.asarray(ref_small),
                               rtol=1e-4, atol=1e-6)

    # Case 2: larger batch with a small block to exercise a multi-step grid
    # (grid >= 2 so both v7x TensorCores get a share).
    fwd_multi = make_ill_reward(block_rows=64)
    a_big = jax.random.uniform(k2, (16384, 2), jnp.float32, -1.0, 1.0)
    out_big = jax.block_until_ready(fwd_multi(a_big))
    ref_big = ill_reward_ref(a_big)
    np.testing.assert_allclose(np.asarray(out_big), np.asarray(ref_big),
                               rtol=1e-4, atol=1e-6)

    print("KERNEL_OK")
</pallas_src>

<mosaic_0001>
module attributes {stable_mosaic.version = 11 : i64} {
  func.func @_kernel(%arg0: i32, %arg1: memref<2x64x128xf32, #tpu.memory_space<vmem>>, %arg2: memref<64x128xf32, #tpu.memory_space<vmem>>) attributes {dimension_semantics = [#tpu.dimension_semantics<parallel>], iteration_bounds = array<i64: 1>, scalar_prefetch = 0 : i64, scratch_operands = 0 : i64, tpu.core_type = #tpu.core_type<tc>, window_params = [{transform_indices = @transform_0, window_bounds = array<i64: 2, 64, 128>}, {transform_indices = @transform_1, window_bounds = array<i64: 64, 128>}]} {
    %c0_i32 = arith.constant 0 : i32
    %c64_i32 = arith.constant 64 : i32
    %0 = arith.muli %c0_i32, %c64_i32 : i32
    %1 = tpu.assume_multiple %0, 64 : i32
    %c0 = arith.constant 0 : index
    %2 = arith.index_cast %1 : i32 to index
    %c0_0 = arith.constant 0 : index
    %3 = vector.load %arg1[%c0, %2, %c0_0] : memref<2x64x128xf32, #tpu.memory_space<vmem>>, vector<1x64x128xf32>
    %4 = vector.shape_cast %3 : vector<1x64x128xf32> to vector<64x128xf32>
    %c1 = arith.constant 1 : index
    %5 = arith.index_cast %1 : i32 to index
    %c0_1 = arith.constant 0 : index
    %6 = vector.load %arg1[%c1, %5, %c0_1] : memref<2x64x128xf32, #tpu.memory_space<vmem>>, vector<1x64x128xf32>
    %7 = vector.shape_cast %6 : vector<1x64x128xf32> to vector<64x128xf32>
    %cst = arith.constant 8.000000e-01 : f32
    %8 = vector.broadcast %cst : f32 to vector<64x128xf32>
    %9 = arith.addf %4, %8 : vector<64x128xf32>
    %cst_2 = arith.constant 8.000000e-01 : f32
    %10 = vector.broadcast %cst_2 : f32 to vector<64x128xf32>
    %11 = arith.subf %4, %10 : vector<64x128xf32>
    %cst_3 = arith.constant 8.000000e-01 : f32
    %12 = vector.broadcast %cst_3 : f32 to vector<64x128xf32>
    %13 = arith.addf %7, %12 : vector<64x128xf32>
    %cst_4 = arith.constant 8.000000e-01 : f32
    %14 = vector.broadcast %cst_4 : f32 to vector<64x128xf32>
    %15 = arith.subf %7, %14 : vector<64x128xf32>
    %16 = arith.mulf %9, %9 : vector<64x128xf32>
    %cst_5 = arith.constant -8.000000e+00 : f32
    %17 = vector.broadcast %cst_5 : f32 to vector<64x128xf32>
    %18 = arith.mulf %17, %16 : vector<64x128xf32>
    %19 = math.exp %18 : vector<64x128xf32>
    %20 = arith.mulf %11, %11 : vector<64x128xf32>
    %cst_6 = arith.constant -8.000000e+00 : f32
    %21 = vector.broadcast %cst_6 : f32 to vector<64x128xf32>
    %22 = arith.mulf %21, %20 : vector<64x128xf32>
    %23 = math.exp %22 : vector<64x128xf32>
    %24 = arith.mulf %13, %13 : vector<64x128xf32>
    %cst_7 = arith.constant -8.000000e+00 : f32
    %25 = vector.broadcast %cst_7 : f32 to vector<64x128xf32>
    %26 = arith.mulf %25, %24 : vector<64x128xf32>
    %27 = math.exp %26 : vector<64x128xf32>
    %28 = arith.mulf %15, %15 : vector<64x128xf32>
    %cst_8 = arith.constant -8.000000e+00 : f32
    %29 = vector.broadcast %cst_8 : f32 to vector<64x128xf32>
    %30 = arith.mulf %29, %28 : vector<64x128xf32>
    %31 = math.exp %30 : vector<64x128xf32>
    %cst_9 = arith.constant 2.54647899 : f32
    %32 = vector.broadcast %cst_9 : f32 to vector<64x128xf32>
    %33 = arith.mulf %32, %31 : vector<64x128xf32>
    %cst_10 = arith.constant 3.8197186 : f32
    %34 = vector.broadcast %cst_10 : f32 to vector<64x128xf32>
    %35 = arith.mulf %34, %27 : vector<64x128xf32>
    %36 = arith.addf %33, %35 : vector<64x128xf32>
    %37 = arith.mulf %19, %36 : vector<64x128xf32>
    %cst_11 = arith.constant 5.09295797 : f32
    %38 = vector.broadcast %cst_11 : f32 to vector<64x128xf32>
    %39 = arith.mulf %38, %31 : vector<64x128xf32>
    %cst_12 = arith.constant 7.6394372 : f32
    %40 = vector.broadcast %cst_12 : f32 to vector<64x128xf32>
    %41 = arith.mulf %40, %27 : vector<64x128xf32>
    %42 = arith.addf %39, %41 : vector<64x128xf32>
    %43 = arith.mulf %23, %42 : vector<64x128xf32>
    %44 = arith.addf %37, %43 : vector<64x128xf32>
    %45 = arith.mulf %4, %4 : vector<64x128xf32>
    %46 = arith.mulf %7, %7 : vector<64x128xf32>
    %47 = arith.addf %45, %46 : vector<64x128xf32>
    %cst_13 = arith.constant -5.000000e+03 : f32
    %48 = vector.broadcast %cst_13 : f32 to vector<64x128xf32>
    %49 = arith.mulf %48, %47 : vector<64x128xf32>
    %50 = math.exp %49 : vector<64x128xf32>
    %cst_14 = arith.constant 1591.54944 : f32
    %51 = vector.broadcast %cst_14 : f32 to vector<64x128xf32>
    %52 = arith.mulf %51, %50 : vector<64x128xf32>
    %53 = arith.addf %44, %52 : vector<64x128xf32>
    %54 = arith.index_cast %1 : i32 to index
    %c0_15 = arith.constant 0 : index
    %55 = vector.load %arg2[%54, %c0_15] : memref<64x128xf32, #tpu.memory_space<vmem>>, vector<64x128xf32>
    tpu.vector_store %arg2[%54, %c0_15], %53 {strides = array<i32>} : memref<64x128xf32, #tpu.memory_space<vmem>>, vector<64x128xf32>,
    %c1_i32 = arith.constant 1 : i32
    return
  }
  func.func @transform_0(%arg0: i32) -> (i32, i32, i32) {
    %c0_i32 = arith.constant 0 : i32
    %c0_i32_0 = arith.constant 0 : i32
    %c0_i32_1 = arith.constant 0 : i32
    return %c0_i32, %arg0, %c0_i32_0 : i32, i32, i32
  }
  func.func @transform_1(%arg0: i32) -> (i32, i32) {
    %c0_i32 = arith.constant 0 : i32
    %c0_i32_0 = arith.constant 0 : i32
    return %arg0, %c0_i32 : i32, i32
  }
}

</mosaic_0001>

<llo_original>
// kernel: forward.1
$region0: #{forward.1}
  #allocation0 [shape = 'u32[]', space=smem, size = 0x4, offset = 0x4, fixed_abs, tag = 'smem constant byte address 0x4 - core index']
  #allocation1 [shape = 'u32[144,128]{1,0:T(1,128)}', space=vmem, size = 0x12000, scoped, tag = 'internal scratch']
  %s0 = inlined_call_operand.vmem [shape: f32[2,64,128], index: 0, kind: input, shape index: {}]
  %s1 = inlined_call_operand.vmem [shape: f32[64,128], index: 1, kind: output, shape index: {}]
  %s2 = sld [smem:[#allocation0]]
  $region14: #{forward.1} parent=0
    _
  %s4 = ssub.s32 1, %s2
  %s5 = scalar_select 0, %s4, %s2
  // Predicated region
  $region2: #{forward.1} parent=0 // pred_check
    _
  $region3: #{forward.1} parent=0 // pred_check_branch
    %7 = sbr.rel (0) target = $region5
  $region4: #{forward.1} parent=0 // pred_region
    _
  $region5: #{forward.1} parent=0 // pred_fallthru
    _
  %v8 = vld [vmem:[%s0] sm:$0xff]
  %v9 = vld [vmem:[%s0 + $0x8] sm:$0xff]
  %v10 = vld [vmem:[%s0 + $0x10] sm:$0xff]
  %v11 = vld [vmem:[%s0 + $0x18] sm:$0xff]
  %v12 = vld [vmem:[%s0 + $0x20] sm:$0xff]
  %v13 = vld [vmem:[%s0 + $0x28] sm:$0xff]
  %v14 = vld [vmem:[%s0 + $0x30] sm:$0xff]
  %v15 = vld [vmem:[%s0 + $0x38] sm:$0xff]
  %s16 = sadd.s32 0, 64
  %s17 = scalar_lea.vmem %s0, %s16
  %v18 = vld [vmem:[%s17] sm:$0xff]
  %v19 = vld [vmem:[%s17 + $0x8] sm:$0xff]
  %v20 = vld [vmem:[%s17 + $0x10] sm:$0xff]
  %v21 = vld [vmem:[%s17 + $0x18] sm:$0xff]
  %v22 = vld [vmem:[%s17 + $0x20] sm:$0xff]
  %v23 = vld [vmem:[%s17 + $0x28] sm:$0xff]
  %v24 = vld [vmem:[%s17 + $0x30] sm:$0xff]
  %v25 = vld [vmem:[%s17 + $0x38] sm:$0xff]
  %v26 = vadd.f32 %v8, 0.8
  %v27 = vadd.f32 %v9, 0.8
  %v28 = vadd.f32 %v10, 0.8
  %v29 = vadd.f32 %v11, 0.8
  %v30 = vadd.f32 %v12, 0.8
  %v31 = vadd.f32 %v13, 0.8
  %v32 = vadd.f32 %v14, 0.8
  %v33 = vadd.f32 %v15, 0.8
  %v34 = vsub.f32 %v8, 0.8
  %v35 = vsub.f32 %v9, 0.8
  %v36 = vsub.f32 %v10, 0.8
  %v37 = vsub.f32 %v11, 0.8
  %v38 = vsub.f32 %v12, 0.8
  %v39 = vsub.f32 %v13, 0.8
  %v40 = vsub.f32 %v14, 0.8
  %v41 = vsub.f32 %v15, 0.8
  %v42 = vadd.f32 %v18, 0.8
  %v43 = vadd.f32 %v19, 0.8
  %v44 = vadd.f32 %v20, 0.8
  %v45 = vadd.f32 %v21, 0.8
  %v46 = vadd.f32 %v22, 0.8
  %v47 = vadd.f32 %v23, 0.8
  %v48 = vadd.f32 %v24, 0.8
  %v49 = vadd.f32 %v25, 0.8
  %v50 = vsub.f32 %v18, 0.8
  %v51 = vsub.f32 %v19, 0.8
  %v52 = vsub.f32 %v20, 0.8
  %v53 = vsub.f32 %v21, 0.8
  %v54 = vsub.f32 %v22, 0.8
  %v55 = vsub.f32 %v23, 0.8
  %v56 = vsub.f32 %v24, 0.8
  %v57 = vsub.f32 %v25, 0.8
  %v58 = vmul.f32 %v26, %v26
  %v59 = vmul.f32 %v27, %v27
  %v60 = vmul.f32 %v28, %v28
  %v61 = vmul.f32 %v29, %v29
  %v62 = vmul.f32 %v30, %v30
  %v63 = vmul.f32 %v31, %v31
  %v64 = vmul.f32 %v32, %v32
  %v65 = vmul.f32 %v33, %v33
  %v66 = vmul.f32 %v58, -8.0
  %v67 = vmul.f32 %v59, -8.0
  %v68 = vmul.f32 %v60, -8.0
  %v69 = vmul.f32 %v61, -8.0
  %v70 = vmul.f32 %v62, -8.0
  %v71 = vmul.f32 %v63, -8.0
  %v72 = vmul.f32 %v64, -8.0
  %v73 = vmul.f32 %v65, -8.0
  %v74 = vmul.f32 %v66, 1.442695
  %v75 = vpow.pop %v74
  %v76 = vmul.f32 %v67, 1.442695
  %v77 = vpow.pop %v76
  %v78 = vmul.f32 %v68, 1.442695
  %v79 = vpow.pop %v78
  %v80 = vmul.f32 %v69, 1.442695
  %v81 = vpow.pop %v80
  %v82 = vmul.f32 %v70, 1.442695
  %v83 = vpow.pop %v82
  %v84 = vmul.f32 %v71, 1.442695
  %v85 = vpow.pop %v84
  %v86 = vmul.f32 %v72, 1.442695
  %v87 = vpow.pop %v86
  %v88 = vmul.f32 %v73, 1.442695
  %v89 = vpow.pop %v88
  %v90 = vmul.f32 %v34, %v34
  %v91 = vmul.f32 %v35, %v35
  %v92 = vmul.f32 %v36, %v36
  %v93 = vmul.f32 %v37, %v37
  %v94 = vmul.f32 %v38, %v38
  %v95 = vmul.f32 %v39, %v39
  %v96 = vmul.f32 %v40, %v40
  %v97 = vmul.f32 %v41, %v41
  %v98 = vmul.f32 %v90, -8.0
  %v99 = vmul.f32 %v91, -8.0
  %v100 = vmul.f32 %v92, -8.0
  %v101 = vmul.f32 %v93, -8.0
  %v102 = vmul.f32 %v94, -8.0
  %v103 = vmul.f32 %v95, -8.0
  %v104 = vmul.f32 %v96, -8.0
  %v105 = vmul.f32 %v97, -8.0
  %v106 = vmul.f32 %v98, 1.442695
  %v107 = vpow.pop %v106
  %v108 = vmul.f32 %v99, 1.442695
  %v109 = vpow.pop %v108
  %v110 = vmul.f32 %v100, 1.442695
  %v111 = vpow.pop %v110
  %v112 = vmul.f32 %v101, 1.442695
  %v113 = vpow.pop %v112
  %v114 = vmul.f32 %v102, 1.442695
  %v115 = vpow.pop %v114
  %v116 = vmul.f32 %v103, 1.442695
  %v117 = vpow.pop %v116
  %v118 = vmul.f32 %v104, 1.442695
  %v119 = vpow.pop %v118
  %v120 = vmul.f32 %v105, 1.442695
  %v121 = vpow.pop %v120
  %v122 = vmul.f32 %v42, %v42
  %v123 = vmul.f32 %v43, %v43
  %v124 = vmul.f32 %v44, %v44
  %v125 = vmul.f32 %v45, %v45
  %v126 = vmul.f32 %v46, %v46
  %v127 = vmul.f32 %v47, %v47
  %v128 = vmul.f32 %v48, %v48
  %v129 = vmul.f32 %v49, %v49
  %v130 = vmul.f32 %v122, -8.0
  %v131 = vmul.f32 %v123, -8.0
  %v132 = vmul.f32 %v124, -8.0
  %v133 = vmul.f32 %v125, -8.0
  %v134 = vmul.f32 %v126, -8.0
  %v135 = vmul.f32 %v127, -8.0
  %v136 = vmul.f32 %v128, -8.0
  %v137 = vmul.f32 %v129, -8.0
  %v138 = vmul.f32 %v130, 1.442695
  %v139 = vpow.pop %v138
  %v140 = vmul.f32 %v131, 1.442695
  %v141 = vpow.pop %v140
  %v142 = vmul.f32 %v132, 1.442695
  %v143 = vpow.pop %v142
  %v144 = vmul.f32 %v133, 1.442695
  %v145 = vpow.pop %v144
  %v146 = vmul.f32 %v134, 1.442695
  %v147 = vpow.pop %v146
  %v148 = vmul.f32 %v135, 1.442695
  %v149 = vpow.pop %v148
  %v150 = vmul.f32 %v136, 1.442695
  %v151 = vpow.pop %v150
  %v152 = vmul.f32 %v137, 1.442695
  %v153 = vpow.pop %v152
  %v154 = vmul.f32 %v50, %v50
  %v155 = vmul.f32 %v51, %v51
  %v156 = vmul.f32 %v52, %v52
  %v157 = vmul.f32 %v53, %v53
  %v158 = vmul.f32 %v54, %v54
  %v159 = vmul.f32 %v55, %v55
  %v160 = vmul.f32 %v56, %v56
  %v161 = vmul.f32 %v57, %v57
  %v162 = vmul.f32 %v154, -8.0
  %v163 = vmul.f32 %v155, -8.0
  %v164 = vmul.f32 %v156, -8.0
  %v165 = vmul.f32 %v157, -8.0
  %v166 = vmul.f32 %v158, -8.0
  %v167 = vmul.f32 %v159, -8.0
  %v168 = vmul.f32 %v160, -8.0
  %v169 = vmul.f32 %v161, -8.0
  %v170 = vmul.f32 %v162, 1.442695
  %v171 = vpow.pop %v170
  %v172 = vmul.f32 %v163, 1.442695
  %v173 = vpow.pop %v172
  %v174 = vmul.f32 %v164, 1.442695
  %v175 = vpow.pop %v174
  %v176 = vmul.f32 %v165, 1.442695
  %v177 = vpow.pop %v176
  %v178 = vmul.f32 %v166, 1.442695
  %v179 = vpow.pop %v178
  %v180 = vmul.f32 %v167, 1.442695
  %v181 = vpow.pop %v180
  %v182 = vmul.f32 %v168, 1.442695
  %v183 = vpow.pop %v182
  %v184 = vmul.f32 %v169, 1.442695
  %v185 = vpow.pop %v184
  %v186 = vmul.f32 %v171, 2.546479
  %v187 = vmul.f32 %v173, 2.546479
  %v188 = vmul.f32 %v175, 2.546479
  %v189 = vmul.f32 %v177, 2.546479
  %v190 = vmul.f32 %v179, 2.546479
  %v191 = vmul.f32 %v181, 2.546479
  %v192 = vmul.f32 %v183, 2.546479
  %v193 = vmul.f32 %v185, 2.546479
  %v194 = vmul.f32 %v139, 3.8197186
  %v195 = vmul.f32 %v141, 3.8197186
  %v196 = vmul.f32 %v143, 3.8197186
  %v197 = vmul.f32 %v145, 3.8197186
  %v198 = vmul.f32 %v147, 3.8197186
  %v199 = vmul.f32 %v149, 3.8197186
  %v200 = vmul.f32 %v151, 3.8197186
  %v201 = vmul.f32 %v153, 3.8197186
  %v202 = vadd.f32 %v186, %v194
  %v203 = vadd.f32 %v187, %v195
  %v204 = vadd.f32 %v188, %v196
  %v205 = vadd.f32 %v189, %v197
  %v206 = vadd.f32 %v190, %v198
  %v207 = vadd.f32 %v191, %v199
  %v208 = vadd.f32 %v192, %v200
  %v209 = vadd.f32 %v193, %v201
  %v210 = vmul.f32 %v75, %v202
  %v211 = vmul.f32 %v77, %v203
  %v212 = vmul.f32 %v79, %v204
  %v213 = vmul.f32 %v81, %v205
  %v214 = vmul.f32 %v83, %v206
  %v215 = vmul.f32 %v85, %v207
  %v216 = vmul.f32 %v87, %v208
  %v217 = vmul.f32 %v89, %v209
  %v218 = vmul.f32 %v171, 5.092958
  %v219 = vmul.f32 %v173, 5.092958
  %v220 = vmul.f32 %v175, 5.092958
  %v221 = vmul.f32 %v177, 5.092958
  %v222 = vmul.f32 %v179, 5.092958
  %v223 = vmul.f32 %v181, 5.092958
  %v224 = vmul.f32 %v183, 5.092958
  %v225 = vmul.f32 %v185, 5.092958
  %v226 = vmul.f32 %v139, 7.639437
  %v227 = vmul.f32 %v141, 7.639437
  %v228 = vmul.f32 %v143, 7.639437
  %v229 = vmul.f32 %v145, 7.639437
  %v230 = vmul.f32 %v147, 7.639437
  %v231 = vmul.f32 %v149, 7.639437
  %v232 = vmul.f32 %v151, 7.639437
  %v233 = vmul.f32 %v153, 7.639437
  %v234 = vadd.f32 %v218, %v226
  %v235 = vadd.f32 %v219, %v227
  %v236 = vadd.f32 %v220, %v228
  %v237 = vadd.f32 %v221, %v229
  %v238 = vadd.f32 %v222, %v230
  %v239 = vadd.f32 %v223, %v231
  %v240 = vadd.f32 %v224, %v232
  %v241 = vadd.f32 %v225, %v233
  %v242 = vmul.f32 %v107, %v234
  %v243 = vmul.f32 %v109, %v235
  %v244 = vmul.f32 %v111, %v236
  %v245 = vmul.f32 %v113, %v237
  %v246 = vmul.f32 %v115, %v238
  %v247 = vmul.f32 %v117, %v239
  %v248 = vmul.f32 %v119, %v240
  %v249 = vmul.f32 %v121, %v241
  %v250 = vadd.f32 %v210, %v242
  %v251 = vadd.f32 %v211, %v243
  %v252 = vadd.f32 %v212, %v244
  %v253 = vadd.f32 %v213, %v245
  %v254 = vadd.f32 %v214, %v246
  %v255 = vadd.f32 %v215, %v247
  %v256 = vadd.f32 %v216, %v248
  %v257 = vadd.f32 %v217, %v249
  %v258 = vmul.f32 %v8, %v8
  %v259 = vmul.f32 %v9, %v9
  %v260 = vmul.f32 %v10, %v10
  %v261 = vmul.f32 %v11, %v11
  %v262 = vmul.f32 %v12, %v12
  %v263 = vmul.f32 %v13, %v13
  %v264 = vmul.f32 %v14, %v14
  %v265 = vmul.f32 %v15, %v15
  %v266 = vmul.f32 %v18, %v18
  %v267 = vmul.f32 %v19, %v19
  %v268 = vmul.f32 %v20, %v20
  %v269 = vmul.f32 %v21, %v21
  %v270 = vmul.f32 %v22, %v22
  %v271 = vmul.f32 %v23, %v23
  %v272 = vmul.f32 %v24, %v24
  %v273 = vmul.f32 %v25, %v25
  %v274 = vadd.f32 %v258, %v266
  %v275 = vadd.f32 %v259, %v267
  %v276 = vadd.f32 %v260, %v268
  %v277 = vadd.f32 %v261, %v269
  %v278 = vadd.f32 %v262, %v270
  %v279 = vadd.f32 %v263, %v271
  %v280 = vadd.f32 %v264, %v272
  %v281 = vadd.f32 %v265, %v273
  %v282 = vmul.f32 %v274, -5000.0
  %v283 = vmul.f32 %v275, -5000.0
  %v284 = vmul.f32 %v276, -5000.0
  %v285 = vmul.f32 %v277, -5000.0
  %v286 = vmul.f32 %v278, -5000.0
  %v287 = vmul.f32 %v279, -5000.0
  %v288 = vmul.f32 %v280, -5000.0
  %v289 = vmul.f32 %v281, -5000.0
  %v290 = vmul.f32 %v282, 1.442695
  %v291 = vpow.pop %v290
  %v292 = vmul.f32 %v283, 1.442695
  %v293 = vpow.pop %v292
  %v294 = vmul.f32 %v284, 1.442695
  %v295 = vpow.pop %v294
  %v296 = vmul.f32 %v285, 1.442695
  %v297 = vpow.pop %v296
  %v298 = vmul.f32 %v286, 1.442695
  %v299 = vpow.pop %v298
  %v300 = vmul.f32 %v287, 1.442695
  %v301 = vpow.pop %v300
  %v302 = vmul.f32 %v288, 1.442695
  %v303 = vpow.pop %v302
  %v304 = vmul.f32 %v289, 1.442695
  %v305 = vpow.pop %v304
  %v306 = vmul.f32 %v291, 1591.5494
  %v307 = vmul.f32 %v293, 1591.5494
  %v308 = vmul.f32 %v295, 1591.5494
  %v309 = vmul.f32 %v297, 1591.5494
  %v310 = vmul.f32 %v299, 1591.5494
  %v311 = vmul.f32 %v301, 1591.5494
  %v312 = vmul.f32 %v303, 1591.5494
  %v313 = vmul.f32 %v305, 1591.5494
  %v314 = vadd.f32 %v250, %v306
  %v315 = vadd.f32 %v251, %v307
  %v316 = vadd.f32 %v252, %v308
  %v317 = vadd.f32 %v253, %v309
  %v318 = vadd.f32 %v254, %v310
  %v319 = vadd.f32 %v255, %v311
  %v320 = vadd.f32 %v256, %v312
  %v321 = vadd.f32 %v257, %v313
  %322 = vst [vmem:[%s1] sm:$0xff] %v314
  %323 = vst [vmem:[%s1 + $0x8] sm:$0xff] %v315
  %324 = vst [vmem:[%s1 + $0x10] sm:$0xff] %v316
  %325 = vst [vmem:[%s1 + $0x18] sm:$0xff] %v317
  %326 = vst [vmem:[%s1 + $0x20] sm:$0xff] %v318
  %327 = vst [vmem:[%s1 + $0x28] sm:$0xff] %v319
  %328 = vst [vmem:[%s1 + $0x30] sm:$0xff] %v320
  %329 = vst [vmem:[%s1 + $0x38] sm:$0xff] %v321
  // Predicated region
  $region6: #{forward.1} parent=0 // pred_check
    _
  $region7: #{forward.1} parent=0 // pred_check_branch
    %331 = sbr.rel (0) target = $region9
  $region8: #{forward.1} parent=0 // pred_region
    _
  $region9: #{forward.1} parent=0 // pred_fallthru
    _
  // Predicated region
  $region10: #{forward.1} parent=0 // pred_check
    _
  $region11: #{forward.1} parent=0 // pred_check_branch
    %333 = sbr.rel (0) target = $region13
  $region12: #{forward.1} parent=0 // pred_region
    _
  $region13: #{forward.1} parent=0 // pred_fallthru
    _

</llo_original>
